<compile_context>
chip_gen: v7x
topology: tpu7x:2x2x1
jax: 0.10.0
libtpu: 0.0.40
codegen_flags: <defaults>
</compile_context>

<pallas_src>
import functools
import math

import jax
import jax.numpy as jnp
from jax import lax
from jax.experimental import pallas as pl
from jax.experimental.pallas import tpu as pltpu

# True-f32 matmuls everywhere outside the kernels (reference + glue), so the
# f32 correctness check is not polluted by XLA's default bf16 matmul passes.
jax.config.update("jax_default_matmul_precision", "highest")


def _vmem_limit_bytes():
    """Per-generation scoped-VMEM budget (don't hard-code 32 MiB everywhere)."""
    try:
        cap = getattr(pltpu.get_tpu_info(), "vmem_capacity_bytes", None)
        if cap:
            # ~70% of physical VMEM (v5e/v6e: ~90 MiB, v7x: ~45 MiB).
            return int(min(cap * 0.7, 96 * 1024 * 1024))
    except Exception:
        pass
    return 32 * 1024 * 1024


_VMEM_LIMIT = _vmem_limit_bytes()


def _pick_tile(dim, prefs=(512, 256, 128)):
    """Largest preferred tile dividing `dim`; else the full dim (small shapes)."""
    for p in prefs:
        if dim % p == 0:
            return p
    return dim


# ---------------------------------------------------------------------------
# Kernel 1: tiled dense linear  y = x @ W.T + b
#   bf16 MXU operands / f32 accumulator; torch-layout weight (d_out, d_in):
#   contract last dims so no transpose is materialized.
# ---------------------------------------------------------------------------
def _linear_kernel(x_ref, w_ref, b_ref, o_ref, acc_ref, *, cdt):
    @pl.when(pl.program_id(2) == 0)
    def _():
        acc_ref[...] = jnp.zeros_like(acc_ref)

    acc_ref[...] += lax.dot_general(
        x_ref[...].astype(cdt), w_ref[...].astype(cdt),
        dimension_numbers=(((1,), (1,)), ((), ())),
        preferred_element_type=jnp.float32,
    )

    @pl.when(pl.program_id(2) == pl.num_programs(2) - 1)
    def _():
        o_ref[...] = (acc_ref[...] + b_ref[...]).astype(o_ref.dtype)


def linear(x2d, w, b, *, compute_dtype, out_dtype=jnp.float32):
    """x2d: (N, d_in); w: (d_out, d_in) torch layout; b: (d_out,)."""
    n, d_in = x2d.shape
    d_out = w.shape[0]
    tm, tn, tk = _pick_tile(n), _pick_tile(d_out), _pick_tile(d_in)
    grid = (n // tm, d_out // tn, d_in // tk)
    return pl.pallas_call(
        functools.partial(_linear_kernel, cdt=compute_dtype),
        out_shape=jax.ShapeDtypeStruct((n, d_out), out_dtype),
        grid_spec=pltpu.PrefetchScalarGridSpec(
            num_scalar_prefetch=0,
            grid=grid,
            in_specs=[
                pl.BlockSpec((tm, tk), lambda i, j, k: (i, k)),
                pl.BlockSpec((tn, tk), lambda i, j, k: (j, k)),
                pl.BlockSpec((1, tn), lambda i, j, k: (0, j)),
            ],
            out_specs=pl.BlockSpec((tm, tn), lambda i, j, k: (i, j)),
            scratch_shapes=[pltpu.VMEM((tm, tn), jnp.float32)],
        ),
        compiler_params=pltpu.CompilerParams(
            dimension_semantics=("parallel", "parallel", "arbitrary"),
            vmem_limit_bytes=_VMEM_LIMIT,
        ),
    )(x2d, w.astype(compute_dtype), b.reshape(1, d_out).astype(jnp.float32))


# ---------------------------------------------------------------------------
# Kernel 2: multi-head attention.  One kernel serves self- and cross-attention:
#   q: (B, Sq, dm), kv: (B, S_kv, 2*dm) fused K|V projection, mask: (B, Sq, S_kv).
#   Grid = (batch, q-tile); K/V slab stays resident across q-tiles.
#   Mask bias generated in-kernel; softmax in f32 with exact normalization.
# ---------------------------------------------------------------------------
def _mha_kernel(q_ref, kv_ref, m_ref, o_ref, *, h, d_k, cdt):
    dm = h * d_k
    q_slab = q_ref[...]                                  # (tq, dm)
    kv = kv_ref[...]                                     # (S_kv, 2*dm)
    bias = jnp.where(m_ref[...] == 0, -1e9, 0.0).astype(jnp.float32)
    scale = 1.0 / math.sqrt(d_k)
    for i in range(h):                                   # h is small & static
        lo = i * d_k
        q = (q_slab[:, lo:lo + d_k].astype(jnp.float32) * scale).astype(cdt)
        k = kv[:, lo:lo + d_k].astype(cdt)
        v = kv[:, dm + lo:dm + lo + d_k].astype(cdt)
        s = lax.dot_general(q, k, dimension_numbers=(((1,), (1,)), ((), ())),
                            preferred_element_type=jnp.float32)
        s = s + bias
        mx = jnp.max(s, axis=-1, keepdims=True)
        p = jnp.exp(s - mx)
        l = jnp.sum(p, axis=-1, keepdims=True)
        p = p / l                                        # exact normalization
        o = jnp.dot(p.astype(cdt), v, preferred_element_type=jnp.float32)
        o_ref[:, lo:lo + d_k] = o.astype(o_ref.dtype)    # stream per head


def attention(q, kv, mask, *, h, compute_dtype):
    B, Sq, dm = q.shape
    S_kv = kv.shape[1]
    tq = _pick_tile(Sq, prefs=(256, 128))
    grid = (B, Sq // tq)
    return pl.pallas_call(
        functools.partial(_mha_kernel, h=h, d_k=dm // h, cdt=compute_dtype),
        out_shape=jax.ShapeDtypeStruct((B, Sq, dm), compute_dtype),
        grid_spec=pltpu.PrefetchScalarGridSpec(
            num_scalar_prefetch=0,
            grid=grid,
            in_specs=[
                pl.BlockSpec((None, tq, dm), lambda b, qi: (b, qi, 0)),
                pl.BlockSpec((None, S_kv, 2 * dm), lambda b, qi: (b, 0, 0)),
                pl.BlockSpec((None, tq, S_kv), lambda b, qi: (b, qi, 0)),
            ],
            out_specs=pl.BlockSpec((None, tq, dm), lambda b, qi: (b, qi, 0)),
        ),
        compiler_params=pltpu.CompilerParams(
            dimension_semantics=("parallel", "parallel"),
            vmem_limit_bytes=_VMEM_LIMIT,
        ),
    )(q, kv, mask)


def _torch_layernorm(y, g, be, eps):
    """torch semantics: unbiased std, eps added to std (not variance)."""
    mean = jnp.mean(y, axis=-1, keepdims=True)
    diff = y - mean
    var = jnp.sum(diff * diff, axis=-1, keepdims=True) / (y.shape[-1] - 1)
    return g * diff / (jnp.sqrt(var) + eps) + be


# ---------------------------------------------------------------------------
# Kernel 3: output projection with residual + LayerNorm fused into the epilogue:
#   out = res + LayerNorm(y @ W.T + b)      (used for both attention W_O)
# ---------------------------------------------------------------------------
def _proj_add_ln_kernel(y_ref, w_ref, b_ref, res_ref, g_ref, be_ref, o_ref,
                        acc_ref, *, eps, cdt):
    @pl.when(pl.program_id(1) == 0)
    def _():
        acc_ref[...] = jnp.zeros_like(acc_ref)

    acc_ref[...] += lax.dot_general(
        y_ref[...].astype(cdt), w_ref[...].astype(cdt),
        dimension_numbers=(((1,), (1,)), ((), ())),
        preferred_element_type=jnp.float32,
    )

    @pl.when(pl.program_id(1) == pl.num_programs(1) - 1)
    def _():
        y = acc_ref[...] + b_ref[...]
        ln = _torch_layernorm(y, g_ref[...], be_ref[...], eps)
        o_ref[...] = (res_ref[...] + ln).astype(o_ref.dtype)


def proj_add_layernorm(y2d, w, b, res2d, gamma, beta, *, compute_dtype, eps=1e-6):
    n, d_in = y2d.shape
    d_out = w.shape[0]                 # full model dim kept per tile (LN reduce)
    tm, tk = _pick_tile(n), _pick_tile(d_in)
    grid = (n // tm, d_in // tk)
    return pl.pallas_call(
        functools.partial(_proj_add_ln_kernel, eps=eps, cdt=compute_dtype),
        out_shape=jax.ShapeDtypeStruct((n, d_out), jnp.float32),
        grid_spec=pltpu.PrefetchScalarGridSpec(
            num_scalar_prefetch=0,
            grid=grid,
            in_specs=[
                pl.BlockSpec((tm, tk), lambda i, k: (i, k)),
                pl.BlockSpec((d_out, tk), lambda i, k: (0, k)),
                pl.BlockSpec((1, d_out), lambda i, k: (0, 0)),
                pl.BlockSpec((tm, d_out), lambda i, k: (i, 0)),
                pl.BlockSpec((1, d_out), lambda i, k: (0, 0)),
                pl.BlockSpec((1, d_out), lambda i, k: (0, 0)),
            ],
            out_specs=pl.BlockSpec((tm, d_out), lambda i, k: (i, 0)),
            scratch_shapes=[pltpu.VMEM((tm, d_out), jnp.float32)],
        ),
        compiler_params=pltpu.CompilerParams(
            dimension_semantics=("parallel", "arbitrary"),
            vmem_limit_bytes=_VMEM_LIMIT,
        ),
    )(y2d, w.astype(compute_dtype), b.reshape(1, d_out).astype(jnp.float32),
      res2d, gamma.reshape(1, d_out), beta.reshape(1, d_out))


# ---------------------------------------------------------------------------
# Kernel 4: fully fused FFN sublayer:
#   out = x + LayerNorm(relu(x @ W1.T + b1) @ W2.T + b2)
#   Grid = (row tiles, d_ff tiles).  The (tm, tf) hidden tile never hits HBM.
# ---------------------------------------------------------------------------
def _ffn_add_ln_kernel(x_ref, w1_ref, b1_ref, w2_ref, b2_ref, g_ref, be_ref,
                       o_ref, acc_ref, *, eps, cdt):
    @pl.when(pl.program_id(1) == 0)
    def _():
        acc_ref[...] = jnp.zeros_like(acc_ref)

    x = x_ref[...].astype(cdt)                           # (tm, dm)
    hid = lax.dot_general(x, w1_ref[...].astype(cdt),
                          dimension_numbers=(((1,), (1,)), ((), ())),
                          preferred_element_type=jnp.float32)
    hid = jnp.maximum(hid + b1_ref[...], 0.0)            # (tm, tf), VMEM-resident
    acc_ref[...] += lax.dot_general(hid.astype(cdt), w2_ref[...].astype(cdt),
                                    dimension_numbers=(((1,), (1,)), ((), ())),
                                    preferred_element_type=jnp.float32)

    @pl.when(pl.program_id(1) == pl.num_programs(1) - 1)
    def _():
        y = acc_ref[...] + b2_ref[...]
        ln = _torch_layernorm(y, g_ref[...], be_ref[...], eps)
        o_ref[...] = (x_ref[...] + ln).astype(o_ref.dtype)


def ffn_add_layernorm(x2d, w1, b1, w2, b2, gamma, beta, *, compute_dtype, eps=1e-6):
    n, dm = x2d.shape
    d_ff = w1.shape[0]
    tm, tf = _pick_tile(n), _pick_tile(d_ff)
    grid = (n // tm, d_ff // tf)
    return pl.pallas_call(
        functools.partial(_ffn_add_ln_kernel, eps=eps, cdt=compute_dtype),
        out_shape=jax.ShapeDtypeStruct((n, dm), jnp.float32),
        grid_spec=pltpu.PrefetchScalarGridSpec(
            num_scalar_prefetch=0,
            grid=grid,
            in_specs=[
                pl.BlockSpec((tm, dm), lambda i, f: (i, 0)),   # x, resident over f
                pl.BlockSpec((tf, dm), lambda i, f: (f, 0)),   # W1 (torch layout)
                pl.BlockSpec((1, tf), lambda i, f: (0, f)),    # b1
                pl.BlockSpec((dm, tf), lambda i, f: (0, f)),   # W2 (torch layout)
                pl.BlockSpec((1, dm), lambda i, f: (0, 0)),    # b2
                pl.BlockSpec((1, dm), lambda i, f: (0, 0)),    # gamma
                pl.BlockSpec((1, dm), lambda i, f: (0, 0)),    # beta
            ],
            out_specs=pl.BlockSpec((tm, dm), lambda i, f: (i, 0)),
            scratch_shapes=[pltpu.VMEM((tm, dm), jnp.float32)],
        ),
        compiler_params=pltpu.CompilerParams(
            dimension_semantics=("parallel", "arbitrary"),
            vmem_limit_bytes=_VMEM_LIMIT,
        ),
    )(x2d, w1.astype(compute_dtype), b1.reshape(1, d_ff).astype(jnp.float32),
      w2.astype(compute_dtype), b2.reshape(1, dm).astype(jnp.float32),
      gamma.reshape(1, dm), beta.reshape(1, dm))


# ---------------------------------------------------------------------------
# DecoderLayer forward (Pallas)
# ---------------------------------------------------------------------------
def decoder_layer_pallas(params, x, memory, src_mask, tgt_mask, *, h,
                         compute_dtype=jnp.bfloat16):
    B, S, dm = x.shape
    S_mem = memory.shape[1]
    N = B * S
    cdt = compute_dtype

    p_sa = params["self_attn"]
    p_ca = params["src_attn"]
    (w_f1, b_f1), (w_f2, b_f2) = params["ff"]
    (g0, be0), (g1, be1), (g2, be2) = params["ln"]

    # Fused K|V projection weights (torch (out,in) layout, concat on out axis).
    w_kv_sa = jnp.concatenate([p_sa[1][0], p_sa[2][0]], axis=0)
    b_kv_sa = jnp.concatenate([p_sa[1][1], p_sa[2][1]], axis=0)
    w_kv_ca = jnp.concatenate([p_ca[1][0], p_ca[2][0]], axis=0)
    b_kv_ca = jnp.concatenate([p_ca[1][1], p_ca[2][1]], axis=0)

    x2 = x.reshape(N, dm)

    # ---- sublayer 0: self-attention; residual+LN fused into W_O epilogue ----
    q = linear(x2, p_sa[0][0], p_sa[0][1], compute_dtype=cdt, out_dtype=cdt)
    kv = linear(x2, w_kv_sa, b_kv_sa, compute_dtype=cdt, out_dtype=cdt)
    att = attention(q.reshape(B, S, dm), kv.reshape(B, S, 2 * dm), tgt_mask,
                    h=h, compute_dtype=cdt)
    x2 = proj_add_layernorm(att.reshape(N, dm), p_sa[3][0], p_sa[3][1],
                            x2, g0, be0, compute_dtype=cdt)

    # ---- sublayer 1: source attention ---------------------------------------
    q = linear(x2, p_ca[0][0], p_ca[0][1], compute_dtype=cdt, out_dtype=cdt)
    kv = linear(memory.reshape(B * S_mem, dm), w_kv_ca, b_kv_ca,
                compute_dtype=cdt, out_dtype=cdt)
    att = attention(q.reshape(B, S, dm), kv.reshape(B, S_mem, 2 * dm), src_mask,
                    h=h, compute_dtype=cdt)
    x2 = proj_add_layernorm(att.reshape(N, dm), p_ca[3][0], p_ca[3][1],
                            x2, g1, be1, compute_dtype=cdt)

    # ---- sublayer 2: fused feed-forward + residual/LN ------------------------
    x2 = ffn_add_layernorm(x2, w_f1, b_f1, w_f2, b_f2, g2, be2, compute_dtype=cdt)
    return x2.reshape(B, S, dm)


# ---------------------------------------------------------------------------
# Pure-JAX reference (mirrors the PyTorch module, eval mode, f32)
# ---------------------------------------------------------------------------
def _ref_layernorm(x, a2, b2, eps=1e-6):
    mean = jnp.mean(x, axis=-1, keepdims=True)
    var = jnp.sum((x - mean) ** 2, axis=-1, keepdims=True) / (x.shape[-1] - 1)
    return a2 * (x - mean) / (jnp.sqrt(var) + eps) + b2


def _ref_mha(p, query, key, value, mask, h):
    B, Sq, dm = query.shape
    d_k = dm // h
    (w_q, b_q), (w_k, b_k), (w_v, b_v), (w_o, b_o) = p

    def lin(x, w, b):
        return x @ w.T + b

    def split(x):
        b_, s_, _ = x.shape
        return x.reshape(b_, s_, h, d_k).transpose(0, 2, 1, 3)

    q, k, v = split(lin(query, w_q, b_q)), split(lin(key, w_k, b_k)), split(lin(value, w_v, b_v))
    scores = jnp.einsum("bhqd,bhkd->bhqk", q, k) / math.sqrt(d_k)
    scores = jnp.where(mask[:, None, :, :] == 0, -1e9, scores)
    p_attn = jax.nn.softmax(scores, axis=-1)
    o = jnp.einsum("bhqk,bhkd->bhqd", p_attn, v)
    o = o.transpose(0, 2, 1, 3).reshape(B, Sq, dm)
    return lin(o, w_o, b_o)


def decoder_layer_reference(params, x, memory, src_mask, tgt_mask, *, h):
    (w_f1, b_f1), (w_f2, b_f2) = params["ff"]
    (g0, be0), (g1, be1), (g2, be2) = params["ln"]

    sa = _ref_mha(params["self_attn"], x, x, x, tgt_mask, h)
    x = x + _ref_layernorm(sa, g0, be0)
    ca = _ref_mha(params["src_attn"], x, memory, memory, src_mask, h)
    x = x + _ref_layernorm(ca, g1, be1)
    ff = jnp.maximum(x @ w_f1.T + b_f1, 0.0) @ w_f2.T + b_f2
    return x + _ref_layernorm(ff, g2, be2)


# ---------------------------------------------------------------------------
if __name__ == "__main__":
    B, S, S_mem, d_model, h, d_ff = 2, 8, 8, 32, 4, 64

    keys = iter(jax.random.split(jax.random.PRNGKey(0), 64))

    def make_linear(d_out, d_in):
        bound = 1.0 / math.sqrt(d_in)
        w = jax.random.uniform(next(keys), (d_out, d_in),
                               minval=-bound, maxval=bound, dtype=jnp.float32)
        b = jax.random.uniform(next(keys), (d_out,),
                               minval=-bound, maxval=bound, dtype=jnp.float32)
        return w, b

    params = {
        "self_attn": [make_linear(d_model, d_model) for _ in range(4)],
        "src_attn": [make_linear(d_model, d_model) for _ in range(4)],
        "ff": (make_linear(d_ff, d_model), make_linear(d_model, d_ff)),
        "ln": [(jnp.ones((d_model,), jnp.float32), jnp.zeros((d_model,), jnp.float32))
               for _ in range(3)],
    }

    x = jax.random.normal(next(keys), (B, S, d_model), dtype=jnp.float32)
    memory = jax.random.normal(next(keys), (B, S_mem, d_model), dtype=jnp.float32)
    tgt_mask = jnp.broadcast_to(jnp.tril(jnp.ones((S, S), jnp.int32)), (B, S, S))
    src_mask = jnp.ones((B, S, S_mem), jnp.int32)

    ref = decoder_layer_reference(params, x, memory, src_mask, tgt_mask, h=h)

    # Strict check: f32 MXU operands everywhere -> should match the f32
    # reference to well under 1e-3.
    out_f32 = decoder_layer_pallas(params, x, memory, src_mask, tgt_mask, h=h,
                                   compute_dtype=jnp.float32)
    out_f32 = jax.block_until_ready(out_f32)
    assert out_f32.shape == (B, S, d_model)
    err_f32 = float(jnp.max(jnp.abs(out_f32 - ref)))
    assert jnp.allclose(out_f32, ref, atol=2e-3, rtol=2e-3), \
        f"f32 path max abs err {err_f32}"

    # Performance path: bf16 MXU operands with f32 accumulation (softmax /
    # LayerNorm / residual stay f32).  Tolerance reflects bf16 operand rounding
    # amplified through three LayerNorms, compared against the pure-f32 ref.
    out_bf16 = decoder_layer_pallas(params, x, memory, src_mask, tgt_mask, h=h,
                                    compute_dtype=jnp.bfloat16)
    out_bf16 = jax.block_until_ready(out_bf16).astype(jnp.float32)
    err_bf16 = float(jnp.max(jnp.abs(out_bf16 - ref)))
    assert jnp.allclose(out_bf16, ref, atol=1e-1, rtol=1e-1), \
        f"bf16 path max abs err {err_bf16}"

    print("KERNEL_OK")
</pallas_src>

<mosaic_0001>
module attributes {stable_mosaic.version = 11 : i64} {
  func.func @_linear_kernel(%arg0: i32, %arg1: i32, %arg2: i32, %arg3: memref<16x32xf32, #tpu.memory_space<vmem>>, %arg4: memref<32x32xf32, #tpu.memory_space<vmem>>, %arg5: memref<1x32xf32, #tpu.memory_space<vmem>>, %arg6: memref<16x32xf32, #tpu.memory_space<vmem>>, %arg7: memref<16x32xf32, #tpu.memory_space<vmem>>) attributes {dimension_semantics = [#tpu.dimension_semantics<parallel>, #tpu.dimension_semantics<parallel>, #tpu.dimension_semantics<arbitrary>], iteration_bounds = array<i64: 1, 1, 1>, scalar_prefetch = 0 : i64, scratch_operands = 1 : i64, tpu.core_type = #tpu.core_type<tc>, window_params = [{transform_indices = @transform_0, window_bounds = array<i64: 16, 32>}, {transform_indices = @transform_1, window_bounds = array<i64: 32, 32>}, {transform_indices = @transform_2, window_bounds = array<i64: 1, 32>}, {transform_indices = @transform_3, window_bounds = array<i64: 16, 32>}]} {
    %c0_i32 = arith.constant 0 : i32
    %0 = arith.cmpi eq, %arg2, %c0_i32 : i32
    %1 = arith.extui %0 : i1 to i32
    %c0_i32_0 = arith.constant 0 : i32
    %2 = arith.cmpi ne, %1, %c0_i32_0 : i32
    scf.if %2 {
      %cst_10 = arith.constant 0.000000e+00 : f32
      %12 = vector.broadcast %cst_10 : f32 to vector<16x32xf32>
      %c0_11 = arith.constant 0 : index
      %c0_12 = arith.constant 0 : index
      %13 = vector.load %arg7[%c0_11, %c0_12] : memref<16x32xf32, #tpu.memory_space<vmem>>, vector<16x32xf32>
      tpu.vector_store %arg7[%c0_11, %c0_12], %12 {strides = array<i32>} : memref<16x32xf32, #tpu.memory_space<vmem>>, vector<16x32xf32>,
    } else {
    }
    %c0 = arith.constant 0 : index
    %c0_1 = arith.constant 0 : index
    %3 = vector.load %arg7[%c0, %c0_1] : memref<16x32xf32, #tpu.memory_space<vmem>>, vector<16x32xf32>
    %c0_2 = arith.constant 0 : index
    %c0_3 = arith.constant 0 : index
    %4 = vector.load %arg3[%c0_2, %c0_3] : memref<16x32xf32, #tpu.memory_space<vmem>>, vector<16x32xf32>
    %c0_4 = arith.constant 0 : index
    %c0_5 = arith.constant 0 : index
    %5 = vector.load %arg4[%c0_4, %c0_5] : memref<32x32xf32, #tpu.memory_space<vmem>>, vector<32x32xf32>
    %cst = arith.constant dense<0.000000e+00> : vector<16x32xf32>
    %6 = tpu.matmul %4, %5, %cst {dimension_numbers = #tpu.dot_dimension_numbers<[1], [1], [0], [0], [0, 0, 1, 0], [], []>, precision = #tpu.contract_precision<fp32>} : vector<16x32xf32>, vector<32x32xf32>, vector<16x32xf32> -> vector<16x32xf32>
    %7 = arith.addf %3, %6 : vector<16x32xf32>
    %c0_6 = arith.constant 0 : index
    %c0_7 = arith.constant 0 : index
    %8 = vector.load %arg7[%c0_6, %c0_7] : memref<16x32xf32, #tpu.memory_space<vmem>>, vector<16x32xf32>
    tpu.vector_store %arg7[%c0_6, %c0_7], %7 {strides = array<i32>} : memref<16x32xf32, #tpu.memory_space<vmem>>, vector<16x32xf32>,
    %c0_i32_8 = arith.constant 0 : i32
    %9 = arith.cmpi eq, %arg2, %c0_i32_8 : i32
    %10 = arith.extui %9 : i1 to i32
    %c0_i32_9 = arith.constant 0 : i32
    %11 = arith.cmpi ne, %10, %c0_i32_9 : i32
    scf.if %11 {
      %c0_10 = arith.constant 0 : index
      %c0_11 = arith.constant 0 : index
      %12 = vector.load %arg7[%c0_10, %c0_11] : memref<16x32xf32, #tpu.memory_space<vmem>>, vector<16x32xf32>
      %c0_12 = arith.constant 0 : index
      %c0_13 = arith.constant 0 : index
      %13 = vector.load %arg5[%c0_12, %c0_13] : memref<1x32xf32, #tpu.memory_space<vmem>>, vector<1x32xf32>
      %14 = vector.broadcast %13 : vector<1x32xf32> to vector<16x32xf32>
      %15 = arith.addf %12, %14 : vector<16x32xf32>
      %c0_14 = arith.constant 0 : index
      %c0_15 = arith.constant 0 : index
      %16 = vector.load %arg6[%c0_14, %c0_15] : memref<16x32xf32, #tpu.memory_space<vmem>>, vector<16x32xf32>
      tpu.vector_store %arg6[%c0_14, %c0_15], %15 {strides = array<i32>} : memref<16x32xf32, #tpu.memory_space<vmem>>, vector<16x32xf32>,
    } else {
    }
    return
  }
  func.func @transform_0(%arg0: i32, %arg1: i32, %arg2: i32) -> (i32, i32) {
    %c0_i32 = arith.constant 0 : i32
    return %arg0, %arg2 : i32, i32
  }
  func.func @transform_1(%arg0: i32, %arg1: i32, %arg2: i32) -> (i32, i32) {
    %c0_i32 = arith.constant 0 : i32
    return %arg1, %arg2 : i32, i32
  }
  func.func @transform_2(%arg0: i32, %arg1: i32, %arg2: i32) -> (i32, i32) {
    %c0_i32 = arith.constant 0 : i32
    %c0_i32_0 = arith.constant 0 : i32
    return %c0_i32, %arg1 : i32, i32
  }
  func.func @transform_3(%arg0: i32, %arg1: i32, %arg2: i32) -> (i32, i32) {
    %c0_i32 = arith.constant 0 : i32
    return %arg0, %arg1 : i32, i32
  }
}

</mosaic_0001>

<llo_original>
// kernel: tpu_custom_call.1
$region0: #{tpu_custom_call.1}
  #allocation0 [shape = 'u32[]', space=smem, size = 0x4, offset = 0x4, fixed_abs, tag = 'smem constant byte address 0x4 - core index']
  #allocation1 [shape = 'u32[144,128]{1,0:T(1,128)}', space=vmem, size = 0x12000, scoped, tag = 'internal scratch']
  #allocation2 [shape = 'f32[16,32]{1,0:T(8,128)}', space=vmem, size = 0x2000, scoped, tag = 'scratch operand']
  %s0 = inlined_call_operand.hbm [shape: f32[16,32], index: 0, kind: input, shape index: {}]
  %s1 = inlined_call_operand.hbm [shape: f32[32,32], index: 1, kind: input, shape index: {}]
  %s2 = inlined_call_operand.vmem [shape: f32[1,32], index: 2, kind: input, shape index: {}]
  %s3 = inlined_call_operand.hbm [shape: f32[16,32], index: 3, kind: output, shape index: {}]
  %s4 = sld [smem:[#allocation0]]
  $region38: #{tpu_custom_call.1} parent=0
    _
  %s6 = ssub.s32 1, %s4
  %s7 = scalar_select 0, %s6, %s4
  $region1: #{tpu_custom_call.1} parent=0
    #allocation3 [shape = 'u8[8192]{0}', space=vmem, size = 0x2000, scoped, tag = 'input window, operand 0, single buffered']
    #allocation4 [shape = 's32[1]{0}', space=sflag, size = 0x4, scoped, tag = 'scoped memory for tpu_custom_call.1']
    #allocation5 [shape = 's32[1]{0}', space=sflag, size = 0x4, scoped, tag = 'scoped memory for tpu_custom_call.1']
    #allocation6 [shape = 'u8[16384]{0}', space=vmem, size = 0x4000, scoped, tag = 'input window, operand 1, single buffered']
    #allocation7 [shape = 's32[1]{0}', space=sflag, size = 0x4, scoped, tag = 'scoped memory for tpu_custom_call.1']
    #allocation8 [shape = 'u8[8192]{0}', space=vmem, size = 0x2000, scoped, tag = 'output window, operand 0, single buffered']
    %8 = vsyncpa [#allocation4], 0
    %9 = vsyncpa [#allocation7], 0
    %10 = vsyncpa [#allocation5], 0
    // Predicated region
    $region2: #{tpu_custom_call.1} parent=1 // pred_check
      _
    $region3: #{tpu_custom_call.1} parent=1 // pred_check_branch
      %12 = sbr.rel (0) target = $region5
    $region4: #{tpu_custom_call.1} parent=1 // pred_region
      %s14 = ssub.s32 256, 256
      %15 = vsyncadd [#allocation4], %s14
      %s16 = sshll.u32 [#allocation3], 4
      %s17 = int_to_ptr.vmem [resolvable:$true] %s16
      %22 = dma.hbm_to_vmem [thread:$0]  %s0, 256, %s17, [#allocation4], 128, 128, 8
    $region5: #{tpu_custom_call.1} parent=1 // pred_fallthru
      _
    // Predicated region
    $region6: #{tpu_custom_call.1} parent=1 // pred_check
      _
    $region7: #{tpu_custom_call.1} parent=1 // pred_check_branch
      %24 = sbr.rel (0) target = $region9
    $region8: #{tpu_custom_call.1} parent=1 // pred_region
      %s26 = ssub.s32 512, 512
      %27 = vsyncadd [#allocation7], %s26
      %s28 = sshll.u32 [#allocation6], 4
      %s29 = int_to_ptr.vmem [resolvable:$true] %s28
      %34 = dma.hbm_to_vmem [thread:$0]  %s1, 512, %s29, [#allocation7], 128, 128, 8
    $region9: #{tpu_custom_call.1} parent=1 // pred_fallthru
      _
    // Predicated region
    $region10: #{tpu_custom_call.1} parent=1 // pred_check
      _
    $region11: #{tpu_custom_call.1} parent=1 // pred_check_branch
      %36 = sbr.rel (0) target = $region13
    $region12: #{tpu_custom_call.1} parent=1 // pred_region
      _
    $region13: #{tpu_custom_call.1} parent=1 // pred_fallthru
      _
    // Predicated region
    $region14: #{tpu_custom_call.1} parent=1 // pred_check
      _
    $region15: #{tpu_custom_call.1} parent=1 // pred_check_branch
      %38 = sbr.rel (0) target = $region17
    $region16: #{tpu_custom_call.1} parent=1 // pred_region
      %39 = dma.done [#allocation4], 256
    $region17: #{tpu_custom_call.1} parent=1 // pred_fallthru
      _
    // Predicated region
    $region18: #{tpu_custom_call.1} parent=1 // pred_check
      _
    $region19: #{tpu_custom_call.1} parent=1 // pred_check_branch
      %41 = sbr.rel (0) target = $region21
    $region20: #{tpu_custom_call.1} parent=1 // pred_region
      %42 = dma.done [#allocation7], 512
    $region21: #{tpu_custom_call.1} parent=1 // pred_fallthru
      _
    %p43 = scmp.eq.s32.totalorder 0, 0
    // Predicated region
    $region22: #{tpu_custom_call.1} parent=1 // pred_check
      %p44 = pneg %p43
    $region23: #{tpu_custom_call.1} parent=1 // pred_check_branch
      %46 = sbr.rel (%p44) target = $region25
    $region24: #{tpu_custom_call.1} parent=1 // pred_region
      %vm47 = vcmask 261120
      %48 = vst.msk [vmem:[#allocation2] sm:$0xff] %vm47, 0.0
      %49 = vst.msk [vmem:[#allocation2 + $0x8] sm:$0xff] %vm47, 0.0
    $region25: #{tpu_custom_call.1} parent=1 // pred_fallthru
      _
    %v50 = vld [vmem:[#allocation2] sm:$0xff]
    %v51 = vld [vmem:[#allocation2 + $0x8] sm:$0xff]
    %v52 = vld [vmem:[#allocation3] sm:$0xff]
    %v53 = vld [vmem:[#allocation3 + $0x8] sm:$0xff]
    %v54 = vld [vmem:[#allocation6] sm:$0xff]
    %v55 = vld [vmem:[#allocation6 + $0x8] sm:$0xff]
    %v56 = vld [vmem:[#allocation6 + $0x10] sm:$0xff]
    %v57 = vld [vmem:[#allocation6 + $0x18] sm:$0xff]
    %vm58 = vcmask 261120
    %v60 = vsel %vm58, %v52, 0
    %v63 = vsel %vm58, %v53, 0
    %v66 = vsel %vm58, %v54, 0
    %v69 = vsel %vm58, %v55, 0
    %v72 = vsel %vm58, %v56, 0
    %v75 = vsel %vm58, %v57, 0
    %77 = vmatprep.subr.mxu0 0.0
    %v78 = vand.u32 %v66, 4294901760
    %79 = vmatpush1.xpose.msra.mxu0 %v78
    %80 = vmatprep.subr.mxu0 0.0
    %v81 = vand.u32 %v69, 4294901760
    %82 = vmatpush1.xpose.msra.mxu0 %v81
    %83 = vmatprep.subr.mxu0 0.0
    %v84 = vand.u32 %v72, 4294901760
    %85 = vmatpush1.xpose.msra.mxu0 %v84
    %86 = vmatprep.subr.mxu0 0.0
    %v87 = vand.u32 %v75, 4294901760
    %88 = vmatpush1.xpose.msra.mxu0 %v87
    %89 = vmatprep.subr.mxu0 0.0
    %90 = vmatpush1.xpose.msra.mxu0 0.0
    %91 = vmatprep.subr.mxu0 0.0
    %92 = vmatpush1.xpose.msra.mxu0 0.0
    %93 = vmatprep.subr.mxu0 0.0
    %94 = vmatpush1.xpose.msra.mxu0 0.0
    %95 = vmatprep.subr.mxu0 0.0
    %96 = vmatpush1.xpose.msra.mxu0 0.0
    %97 = vmatprep.subr.mxu0 0.0
    %98 = vmatpush1.xpose.msra.mxu0 0.0
    %99 = vmatprep.subr.mxu0 0.0
    %100 = vmatpush1.xpose.msra.mxu0 0.0
    %101 = vmatprep.subr.mxu0 0.0
    %102 = vmatpush1.xpose.msra.mxu0 0.0
    %103 = vmatprep.subr.mxu0 0.0
    %104 = vmatpush1.xpose.msra.mxu0 0.0
    %105 = vmatprep.subr.mxu0 0.0
    %106 = vmatpush1.xpose.msra.mxu0 0.0
    %107 = vmatprep.subr.mxu0 0.0
    %108 = vmatpush1.xpose.msra.mxu0 0.0
    %109 = vmatprep.subr.mxu0 0.0
    %110 = vmatpush1.xpose.msra.mxu0 0.0
    %111 = vmatprep.subr.mxu0 0.0
    %112 = vmatpush1.xpose.msra.mxu0 0.0
    %113 = vmatprep.subr.mxu0 0.0
    %114 = vmatpush1.xpose.msra.mxu0 0.0
    %115 = vmatprep.subr.mxu0 0.0
    %116 = vmatpush1.xpose.msra.mxu0 0.0
    %117 = vmatprep.subr.mxu0 0.0
    %118 = vmatpush1.xpose.msra.mxu0 0.0
    %119 = vmatprep.subr.mxu0 0.0
    %120 = vmatpush1.xpose.msra.mxu0 0.0
    %121 = vmatprep.subr.mxu0 0.0
    %122 = vmatpush1.xpose.msra.mxu0 0.0
    %123 = vmatprep.subr.mxu0 0.0
    %124 = vmatpush1.xpose.msra.mxu0 0.0
    %125 = vmatprep.subr.mxu0 0.0
    %126 = vmatpush1.xpose.msra.mxu0 0.0
    %127 = vmatprep.subr.mxu0 0.0
    %128 = vmatpush1.xpose.msra.mxu0 0.0
    %129 = vmatprep.subr.mxu0 0.0
    %130 = vmatpush1.xpose.msra.mxu0 0.0
    %131 = vmatprep.subr.mxu0 0.0
    %132 = vmatpush1.xpose.msra.mxu0 0.0
    %133 = vmatprep.subr.mxu0 0.0
    %134 = vmatpush1.xpose.msra.mxu0 0.0
    %135 = vmatprep.subr.mxu0 0.0
    %136 = vmatpush1.xpose.msra.mxu0 0.0
    %137 = vmatprep.subr.mxu0 0.0
    %138 = vmatpush1.xpose.msra.mxu0 0.0
    %139 = vmatprep.subr.mxu0 0.0
    %140 = vmatpush1.xpose.msra.mxu0 0.0
    %141 = vmatprep.subr.mxu0 0.0
    %142 = vmatpush1.xpose.msra.mxu0 0.0
    %143 = vmatprep.subr.mxu0 0.0
    %144 = vmatpush1.xpose.msra.mxu0 0.0
    %145 = vmatprep.mubr.f32.mxu0 0.0
    %v146 = vand.u32 %v60, 4294901760
    %v147 = vsub.f32 %v60, %v146
    %v148 = vand.u32 %v147, 4294901760
    %v149 = vsub.f32 %v147, %v148
    %v150 = vand.u32 %v149, 4294901760
    %151 = vmatmul.mubr.f32.gmra.mrb[0].mxu0 %v150
    %v152 = vpop.f32.mrb[0].mxu0
    %v153 = vadd.f32 0.0, %v152
    %v154 = vpop.f32.mrb[0].mxu0
    %155 = vmatprep.mubr.f32.mxu0 0.0
    %v156 = vand.u32 %v63, 4294901760
    %v157 = vsub.f32 %v63, %v156
    %v158 = vand.u32 %v157, 4294901760
    %v159 = vsub.f32 %v157, %v158
    %v160 = vand.u32 %v159, 4294901760
    %161 = vmatmul.mubr.f32.gmra.mrb[0].mxu0 %v160
    %v162 = vpop.f32.mrb[0].mxu0
    %v163 = vadd.f32 0.0, %v162
    %v164 = vpop.f32.mrb[0].mxu0
    %165 = vdwg.mxu0
    %166 = vmatprep.subr.mxu0 0.0
    %v167 = vand.u32 %v66, 4294901760
    %v168 = vsub.f32 %v66, %v167
    %v169 = vand.u32 %v168, 4294901760
    %v170 = vsub.f32 %v168, %v169
    %v171 = vand.u32 %v170, 4294901760
    %172 = vmatpush1.xpose.msra.mxu0 %v171
    %173 = vmatprep.subr.mxu0 0.0
    %v174 = vand.u32 %v69, 4294901760
    %v175 = vsub.f32 %v69, %v174
    %v176 = vand.u32 %v175, 4294901760
    %v177 = vsub.f32 %v175, %v176
    %v178 = vand.u32 %v177, 4294901760
    %179 = vmatpush1.xpose.msra.mxu0 %v178
    %180 = vmatprep.subr.mxu0 0.0
    %v181 = vand.u32 %v72, 4294901760
    %v182 = vsub.f32 %v72, %v181
    %v183 = vand.u32 %v182, 4294901760
    %v184 = vsub.f32 %v182, %v183
    %v185 = vand.u32 %v184, 4294901760
    %186 = vmatpush1.xpose.msra.mxu0 %v185
    %187 = vmatprep.subr.mxu0 0.0
    %v188 = vand.u32 %v75, 4294901760
    %v189 = vsub.f32 %v75, %v188
    %v190 = vand.u32 %v189, 4294901760
    %v191 = vsub.f32 %v189, %v190
    %v192 = vand.u32 %v191, 4294901760
    %193 = vmatpush1.xpose.msra.mxu0 %v192
    %194 = vmatprep.subr.mxu0 0.0
    %195 = vmatpush1.xpose.msra.mxu0 0.0
    %196 = vmatprep.subr.mxu0 0.0
    %197 = vmatpush1.xpose.msra.mxu0 0.0
    %198 = vmatprep.subr.mxu0 0.0
    %199 = vmatpush1.xpose.msra.mxu0 0.0
    %200 = vmatprep.subr.mxu0 0.0
    %201 = vmatpush1.xpose.msra.mxu0 0.0
    %202 = vmatprep.subr.mxu0 0.0
    %203 = vmatpush1.xpose.msra.mxu0 0.0
    %204 = vmatprep.subr.mxu0 0.0
    %205 = vmatpush1.xpose.msra.mxu0 0.0
    %206 = vmatprep.subr.mxu0 0.0
    %207 = vmatpush1.xpose.msra.mxu0 0.0
    %208 = vmatprep.subr.mxu0 0.0
    %209 = vmatpush1.xpose.msra.mxu0 0.0
    %210 = vmatprep.subr.mxu0 0.0
    %211 = vmatpush1.xpose.msra.mxu0 0.0
    %212 = vmatprep.subr.mxu0 0.0
    %213 = vmatpush1.xpose.msra.mxu0 0.0
    %214 = vmatprep.subr.mxu0 0.0
    %215 = vmatpush1.xpose.msra.mxu0 0.0
    %216 = vmatprep.subr.mxu0 0.0
    %217 = vmatpush1.xpose.msra.mxu0 0.0
    %218 = vmatprep.subr.mxu0 0.0
    %219 = vmatpush1.xpose.msra.mxu0 0.0
    %220 = vmatprep.subr.mxu0 0.0
    %221 = vmatpush1.xpose.msra.mxu0 0.0
    %222 = vmatprep.subr.mxu0 0.0
    %223 = vmatpush1.xpose.msra.mxu0 0.0
    %224 = vmatprep.subr.mxu0 0.0
    %225 = vmatpush1.xpose.msra.mxu0 0.0
    %226 = vmatprep.subr.mxu0 0.0
    %227 = vmatpush1.xpose.msra.mxu0 0.0
    %228 = vmatprep.subr.mxu0 0.0
    %229 = vmatpush1.xpose.msra.mxu0 0.0
    %230 = vmatprep.subr.mxu0 0.0
    %231 = vmatpush1.xpose.msra.mxu0 0.0
    %232 = vmatprep.subr.mxu0 0.0
    %233 = vmatpush1.xpose.msra.mxu0 0.0
    %234 = vmatprep.subr.mxu0 0.0
    %235 = vmatpush1.xpose.msra.mxu0 0.0
    %236 = vmatprep.subr.mxu0 0.0
    %237 = vmatpush1.xpose.msra.mxu0 0.0
    %238 = vmatprep.subr.mxu0 0.0
    %239 = vmatpush1.xpose.msra.mxu0 0.0
    %240 = vmatprep.subr.mxu0 0.0
    %241 = vmatpush1.xpose.msra.mxu0 0.0
    %242 = vmatprep.subr.mxu0 0.0
    %243 = vmatpush1.xpose.msra.mxu0 0.0
    %244 = vmatprep.subr.mxu0 0.0
    %245 = vmatpush1.xpose.msra.mxu0 0.0
    %246 = vmatprep.subr.mxu0 0.0
    %247 = vmatpush1.xpose.msra.mxu0 0.0
    %248 = vmatprep.subr.mxu0 0.0
    %249 = vmatpush1.xpose.msra.mxu0 0.0
    %250 = vmatprep.mubr.f32.mxu0 0.0
    %v251 = vand.u32 %v60, 4294901760
    %252 = vmatmul.mubr.f32.gmra.mrb[0].mxu0 %v251
    %v253 = vpop.f32.mrb[0].mxu0
    %v254 = vadd.f32 %v153, %v253
    %v255 = vpop.f32.mrb[0].mxu0
    %256 = vmatprep.mubr.f32.mxu0 0.0
    %v257 = vand.u32 %v63, 4294901760
    %258 = vmatmul.mubr.f32.gmra.mrb[0].mxu0 %v257
    %v259 = vpop.f32.mrb[0].mxu0
    %v260 = vadd.f32 %v163, %v259
    %v261 = vpop.f32.mrb[0].mxu0
    %262 = vdwg.mxu0
    %263 = vmatprep.subr.mxu0 0.0
    %v264 = vand.u32 %v66, 4294901760
    %v265 = vsub.f32 %v66, %v264
    %266 = vmatpush1.xpose.msra.mxu0 %v265
    %267 = vmatprep.subr.mxu0 0.0
    %v268 = vand.u32 %v69, 4294901760
    %v269 = vsub.f32 %v69, %v268
    %270 = vmatpush1.xpose.msra.mxu0 %v269
    %271 = vmatprep.subr.mxu0 0.0
    %v272 = vand.u32 %v72, 4294901760
    %v273 = vsub.f32 %v72, %v272
    %274 = vmatpush1.xpose.msra.mxu0 %v273
    %275 = vmatprep.subr.mxu0 0.0
    %v276 = vand.u32 %v75, 4294901760
    %v277 = vsub.f32 %v75, %v276
    %278 = vmatpush1.xpose.msra.mxu0 %v277
    %279 = vmatprep.subr.mxu0 0.0
    %280 = vmatpush1.xpose.msra.mxu0 0.0
    %281 = vmatprep.subr.mxu0 0.0
    %282 = vmatpush1.xpose.msra.mxu0 0.0
    %283 = vmatprep.subr.mxu0 0.0
    %284 = vmatpush1.xpose.msra.mxu0 0.0
    %285 = vmatprep.subr.mxu0 0.0
    %286 = vmatpush1.xpose.msra.mxu0 0.0
    %287 = vmatprep.subr.mxu0 0.0
    %288 = vmatpush1.xpose.msra.mxu0 0.0
    %289 = vmatprep.subr.mxu0 0.0
    %290 = vmatpush1.xpose.msra.mxu0 0.0
    %291 = vmatprep.subr.mxu0 0.0
    %292 = vmatpush1.xpose.msra.mxu0 0.0
    %293 = vmatprep.subr.mxu0 0.0
    %294 = vmatpush1.xpose.msra.mxu0 0.0
    %295 = vmatprep.subr.mxu0 0.0
    %296 = vmatpush1.xpose.msra.mxu0 0.0
    %297 = vmatprep.subr.mxu0 0.0
    %298 = vmatpush1.xpose.msra.mxu0 0.0
    %299 = vmatprep.subr.mxu0 0.0
    %300 = vmatpush1.xpose.msra.mxu0 0.0
    %301 = vmatprep.subr.mxu0 0.0
    %302 = vmatpush1.xpose.msra.mxu0 0.0
    %303 = vmatprep.subr.mxu0 0.0
    %304 = vmatpush1.xpose.msra.mxu0 0.0
    %305 = vmatprep.subr.mxu0 0.0
    %306 = vmatpush1.xpose.msra.mxu0 0.0
    %307 = vmatprep.subr.mxu0 0.0
    %308 = vmatpush1.xpose.msra.mxu0 0.0
    %309 = vmatprep.subr.mxu0 0.0
    %310 = vmatpush1.xpose.msra.mxu0 0.0
    %311 = vmatprep.subr.mxu0 0.0
    %312 = vmatpush1.xpose.msra.mxu0 0.0
    %313 = vmatprep.subr.mxu0 0.0
    %314 = vmatpush1.xpose.msra.mxu0 0.0
    %315 = vmatprep.subr.mxu0 0.0
    %316 = vmatpush1.xpose.msra.mxu0 0.0
    %317 = vmatprep.subr.mxu0 0.0
    %318 = vmatpush1.xpose.msra.mxu0 0.0
    %319 = vmatprep.subr.mxu0 0.0
    %320 = vmatpush1.xpose.msra.mxu0 0.0
    %321 = vmatprep.subr.mxu0 0.0
    %322 = vmatpush1.xpose.msra.mxu0 0.0
    %323 = vmatprep.subr.mxu0 0.0
    %324 = vmatpush1.xpose.msra.mxu0 0.0
    %325 = vmatprep.subr.mxu0 0.0
    %326 = vmatpush1.xpose.msra.mxu0 0.0
    %327 = vmatprep.subr.mxu0 0.0
    %328 = vmatpush1.xpose.msra.mxu0 0.0
    %329 = vmatprep.subr.mxu0 0.0
    %330 = vmatpush1.xpose.msra.mxu0 0.0
    %331 = vmatprep.subr.mxu0 0.0
    %332 = vmatpush1.xpose.msra.mxu0 0.0
    %333 = vmatprep.subr.mxu0 0.0
    %334 = vmatpush1.xpose.msra.mxu0 0.0
    %335 = vmatprep.mubr.f32.mxu0 0.0
    %v336 = vand.u32 %v60, 4294901760
    %v337 = vsub.f32 %v60, %v336
    %338 = vmatmul.mubr.f32.gmra.mrb[0].mxu0 %v337
    %v339 = vpop.f32.mrb[0].mxu0
    %v340 = vadd.f32 %v254, %v339
    %v341 = vpop.f32.mrb[0].mxu0
    %342 = vmatprep.mubr.f32.mxu0 0.0
    %v343 = vand.u32 %v63, 4294901760
    %v344 = vsub.f32 %v63, %v343
    %345 = vmatmul.mubr.f32.gmra.mrb[0].mxu0 %v344
    %v346 = vpop.f32.mrb[0].mxu0
    %v347 = vadd.f32 %v260, %v346
    %v348 = vpop.f32.mrb[0].mxu0
    %349 = vdwg.mxu0
    %350 = vmatprep.subr.mxu0 0.0
    %v351 = vand.u32 %v66, 4294901760
    %352 = vmatpush1.xpose.msra.mxu0 %v351
    %353 = vmatprep.subr.mxu0 0.0
    %v354 = vand.u32 %v69, 4294901760
    %355 = vmatpush1.xpose.msra.mxu0 %v354
    %356 = vmatprep.subr.mxu0 0.0
    %v357 = vand.u32 %v72, 4294901760
    %358 = vmatpush1.xpose.msra.mxu0 %v357
    %359 = vmatprep.subr.mxu0 0.0
    %v360 = vand.u32 %v75, 4294901760
    %361 = vmatpush1.xpose.msra.mxu0 %v360
    %362 = vmatprep.subr.mxu0 0.0
    %363 = vmatpush1.xpose.msra.mxu0 0.0
    %364 = vmatprep.subr.mxu0 0.0
    %365 = vmatpush1.xpose.msra.mxu0 0.0
    %366 = vmatprep.subr.mxu0 0.0
    %367 = vmatpush1.xpose.msra.mxu0 0.0
    %368 = vmatprep.subr.mxu0 0.0
    %369 = vmatpush1.xpose.msra.mxu0 0.0
    %370 = vmatprep.subr.mxu0 0.0
    %371 = vmatpush1.xpose.msra.mxu0 0.0
    %372 = vmatprep.subr.mxu0 0.0
    %373 = vmatpush1.xpose.msra.mxu0 0.0
    %374 = vmatprep.subr.mxu0 0.0
    %375 = vmatpush1.xpose.msra.mxu0 0.0
    %376 = vmatprep.subr.mxu0 0.0
    %377 = vmatpush1.xpose.msra.mxu0 0.0
    %378 = vmatprep.subr.mxu0 0.0
    %379 = vmatpush1.xpose.msra.mxu0 0.0
    %380 = vmatprep.subr.mxu0 0.0
    %381 = vmatpush1.xpose.msra.mxu0 0.0
    %382 = vmatprep.subr.mxu0 0.0
    %383 = vmatpush1.xpose.msra.mxu0 0.0
    %384 = vmatprep.subr.mxu0 0.0
    %385 = vmatpush1.xpose.msra.mxu0 0.0
    %386 = vmatprep.subr.mxu0 0.0
    %387 = vmatpush1.xpose.msra.mxu0 0.0
    %388 = vmatprep.subr.mxu0 0.0
    %389 = vmatpush1.xpose.msra.mxu0 0.0
    %390 = vmatprep.subr.mxu0 0.0
    %391 = vmatpush1.xpose.msra.mxu0 0.0
    %392 = vmatprep.subr.mxu0 0.0
    %393 = vmatpush1.xpose.msra.mxu0 0.0
    %394 = vmatprep.subr.mxu0 0.0
    %395 = vmatpush1.xpose.msra.mxu0 0.0
    %396 = vmatprep.subr.mxu0 0.0
    %397 = vmatpush1.xpose.msra.mxu0 0.0
    %398 = vmatprep.subr.mxu0 0.0
    %399 = vmatpush1.xpose.msra.mxu0 0.0
    %400 = vmatprep.subr.mxu0 0.0
    %401 = vmatpush1.xpose.msra.mxu0 0.0
    %402 = vmatprep.subr.mxu0 0.0
    %403 = vmatpush1.xpose.msra.mxu0 0.0
    %404 = vmatprep.subr.mxu0 0.0
    %405 = vmatpush1.xpose.msra.mxu0 0.0
    %406 = vmatprep.subr.mxu0 0.0
    %407 = vmatpush1.xpose.msra.mxu0 0.0
    %408 = vmatprep.subr.mxu0 0.0
    %409 = vmatpush1.xpose.msra.mxu0 0.0
    %410 = vmatprep.subr.mxu0 0.0
    %411 = vmatpush1.xpose.msra.mxu0 0.0
    %412 = vmatprep.subr.mxu0 0.0
    %413 = vmatpush1.xpose.msra.mxu0 0.0
    %414 = vmatprep.subr.mxu0 0.0
    %415 = vmatpush1.xpose.msra.mxu0 0.0
    %416 = vmatprep.subr.mxu0 0.0
    %417 = vmatpush1.xpose.msra.mxu0 0.0
    %418 = vmatprep.mubr.f32.mxu0 0.0
    %v419 = vand.u32 %v60, 4294901760
    %v420 = vsub.f32 %v60, %v419
    %v421 = vand.u32 %v420, 4294901760
    %422 = vmatmul.mubr.f32.gmra.mrb[0].mxu0 %v421
    %v423 = vpop.f32.mrb[0].mxu0
    %v424 = vadd.f32 %v340, %v423
    %v425 = vpop.f32.mrb[0].mxu0
    %426 = vmatprep.mubr.f32.mxu0 0.0
    %v427 = vand.u32 %v63, 4294901760
    %v428 = vsub.f32 %v63, %v427
    %v429 = vand.u32 %v428, 4294901760
    %430 = vmatmul.mubr.f32.gmra.mrb[0].mxu0 %v429
    %v431 = vpop.f32.mrb[0].mxu0
    %v432 = vadd.f32 %v347, %v431
    %v433 = vpop.f32.mrb[0].mxu0
    %434 = vdwg.mxu0
    %435 = vmatprep.subr.mxu0 0.0
    %v436 = vand.u32 %v66, 4294901760
    %v437 = vsub.f32 %v66, %v436
    %v438 = vand.u32 %v437, 4294901760
    %439 = vmatpush1.xpose.msra.mxu0 %v438
    %440 = vmatprep.subr.mxu0 0.0
    %v441 = vand.u32 %v69, 4294901760
    %v442 = vsub.f32 %v69, %v441
    %v443 = vand.u32 %v442, 4294901760
    %444 = vmatpush1.xpose.msra.mxu0 %v443
    %445 = vmatprep.subr.mxu0 0.0
    %v446 = vand.u32 %v72, 4294901760
    %v447 = vsub.f32 %v72, %v446
    %v448 = vand.u32 %v447, 4294901760
    %449 = vmatpush1.xpose.msra.mxu0 %v448
    %450 = vmatprep.subr.mxu0 0.0
    %v451 = vand.u32 %v75, 4294901760
    %v452 = vsub.f32 %v75, %v451
    %v453 = vand.u32 %v452, 4294901760
    %454 = vmatpush1.xpose.msra.mxu0 %v453
    %455 = vmatprep.subr.mxu0 0.0
    %456 = vmatpush1.xpose.msra.mxu0 0.0
    %457 = vmatprep.subr.mxu0 0.0
    %458 = vmatpush1.xpose.msra.mxu0 0.0
    %459 = vmatprep.subr.mxu0 0.0
    %460 = vmatpush1.xpose.msra.mxu0 0.0
    %461 = vmatprep.subr.mxu0 0.0
    %462 = vmatpush1.xpose.msra.mxu0 0.0
    %463 = vmatprep.subr.mxu0 0.0
    %464 = vmatpush1.xpose.msra.mxu0 0.0
    %465 = vmatprep.subr.mxu0 0.0
    %466 = vmatpush1.xpose.msra.mxu0 0.0
    %467 = vmatprep.subr.mxu0 0.0
    %468 = vmatpush1.xpose.msra.mxu0 0.0
    %469 = vmatprep.subr.mxu0 0.0
    %470 = vmatpush1.xpose.msra.mxu0 0.0
    %471 = vmatprep.subr.mxu0 0.0
    %472 = vmatpush1.xpose.msra.mxu0 0.0
    %473 = vmatprep.subr.mxu0 0.0
    %474 = vmatpush1.xpose.msra.mxu0 0.0
    %475 = vmatprep.subr.mxu0 0.0
    %476 = vmatpush1.xpose.msra.mxu0 0.0
    %477 = vmatprep.subr.mxu0 0.0
    %478 = vmatpush1.xpose.msra.mxu0 0.0
    %479 = vmatprep.subr.mxu0 0.0
    %480 = vmatpush1.xpose.msra.mxu0 0.0
    %481 = vmatprep.subr.mxu0 0.0
    %482 = vmatpush1.xpose.msra.mxu0 0.0
    %483 = vmatprep.subr.mxu0 0.0
    %484 = vmatpush1.xpose.msra.mxu0 0.0
    %485 = vmatprep.subr.mxu0 0.0
    %486 = vmatpush1.xpose.msra.mxu0 0.0
    %487 = vmatprep.subr.mxu0 0.0
    %488 = vmatpush1.xpose.msra.mxu0 0.0
    %489 = vmatprep.subr.mxu0 0.0
    %490 = vmatpush1.xpose.msra.mxu0 0.0
    %491 = vmatprep.subr.mxu0 0.0
    %492 = vmatpush1.xpose.msra.mxu0 0.0
    %493 = vmatprep.subr.mxu0 0.0
    %494 = vmatpush1.xpose.msra.mxu0 0.0
    %495 = vmatprep.subr.mxu0 0.0
    %496 = vmatpush1.xpose.msra.mxu0 0.0
    %497 = vmatprep.subr.mxu0 0.0
    %498 = vmatpush1.xpose.msra.mxu0 0.0
    %499 = vmatprep.subr.mxu0 0.0
    %500 = vmatpush1.xpose.msra.mxu0 0.0
    %501 = vmatprep.subr.mxu0 0.0
    %502 = vmatpush1.xpose.msra.mxu0 0.0
    %503 = vmatprep.subr.mxu0 0.0
    %504 = vmatpush1.xpose.msra.mxu0 0.0
    %505 = vmatprep.subr.mxu0 0.0
    %506 = vmatpush1.xpose.msra.mxu0 0.0
    %507 = vmatprep.subr.mxu0 0.0
    %508 = vmatpush1.xpose.msra.mxu0 0.0
    %509 = vmatprep.subr.mxu0 0.0
    %510 = vmatpush1.xpose.msra.mxu0 0.0
    %511 = vmatprep.mubr.f32.mxu0 0.0
    %v512 = vand.u32 %v60, 4294901760
    %513 = vmatmul.mubr.f32.gmra.mrb[0].mxu0 %v512
    %v514 = vpop.f32.mrb[0].mxu0
    %v515 = vadd.f32 %v424, %v514
    %v516 = vpop.f32.mrb[0].mxu0
    %517 = vmatprep.mubr.f32.mxu0 0.0
    %v518 = vand.u32 %v63, 4294901760
    %519 = vmatmul.mubr.f32.gmra.mrb[0].mxu0 %v518
    %v520 = vpop.f32.mrb[0].mxu0
    %v521 = vadd.f32 %v432, %v520
    %v522 = vpop.f32.mrb[0].mxu0
    %523 = vdwg.mxu0
    %524 = vmatprep.subr.mxu0 0.0
    %v525 = vand.u32 %v66, 4294901760
    %526 = vmatpush1.xpose.msra.mxu0 %v525
    %527 = vmatprep.subr.mxu0 0.0
    %v528 = vand.u32 %v69, 4294901760
    %529 = vmatpush1.xpose.msra.mxu0 %v528
    %530 = vmatprep.subr.mxu0 0.0
    %v531 = vand.u32 %v72, 4294901760
    %532 = vmatpush1.xpose.msra.mxu0 %v531
    %533 = vmatprep.subr.mxu0 0.0
    %v534 = vand.u32 %v75, 4294901760
    %535 = vmatpush1.xpose.msra.mxu0 %v534
    %536 = vmatprep.subr.mxu0 0.0
    %537 = vmatpush1.xpose.msra.mxu0 0.0
    %538 = vmatprep.subr.mxu0 0.0
    %539 = vmatpush1.xpose.msra.mxu0 0.0
    %540 = vmatprep.subr.mxu0 0.0
    %541 = vmatpush1.xpose.msra.mxu0 0.0
    %542 = vmatprep.subr.mxu0 0.0
    %543 = vmatpush1.xpose.msra.mxu0 0.0
    %544 = vmatprep.subr.mxu0 0.0
    %545 = vmatpush1.xpose.msra.mxu0 0.0
    %546 = vmatprep.subr.mxu0 0.0
    %547 = vmatpush1.xpose.msra.mxu0 0.0
    %548 = vmatprep.subr.mxu0 0.0
    %549 = vmatpush1.xpose.msra.mxu0 0.0
    %550 = vmatprep.subr.mxu0 0.0
    %551 = vmatpush1.xpose.msra.mxu0 0.0
    %552 = vmatprep.subr.mxu0 0.0
    %553 = vmatpush1.xpose.msra.mxu0 0.0
    %554 = vmatprep.subr.mxu0 0.0
    %555 = vmatpush1.xpose.msra.mxu0 0.0
    %556 = vmatprep.subr.mxu0 0.0
    %557 = vmatpush1.xpose.msra.mxu0 0.0
    %558 = vmatprep.subr.mxu0 0.0
    %559 = vmatpush1.xpose.msra.mxu0 0.0
    %560 = vmatprep.subr.mxu0 0.0
    %561 = vmatpush1.xpose.msra.mxu0 0.0
    %562 = vmatprep.subr.mxu0 0.0
    %563 = vmatpush1.xpose.msra.mxu0 0.0
    %564 = vmatprep.subr.mxu0 0.0
    %565 = vmatpush1.xpose.msra.mxu0 0.0
    %566 = vmatprep.subr.mxu0 0.0
    %567 = vmatpush1.xpose.msra.mxu0 0.0
    %568 = vmatprep.subr.mxu0 0.0
    %569 = vmatpush1.xpose.msra.mxu0 0.0
    %570 = vmatprep.subr.mxu0 0.0
    %571 = vmatpush1.xpose.msra.mxu0 0.0
    %572 = vmatprep.subr.mxu0 0.0
    %573 = vmatpush1.xpose.msra.mxu0 0.0
    %574 = vmatprep.subr.mxu0 0.0
    %575 = vmatpush1.xpose.msra.mxu0 0.0
    %576 = vmatprep.subr.mxu0 0.0
    %577 = vmatpush1.xpose.msra.mxu0 0.0
    %578 = vmatprep.subr.mxu0 0.0
    %579 = vmatpush1.xpose.msra.mxu0 0.0
    %580 = vmatprep.subr.mxu0 0.0
    %581 = vmatpush1.xpose.msra.mxu0 0.0
    %582 = vmatprep.subr.mxu0 0.0
    %583 = vmatpush1.xpose.msra.mxu0 0.0
    %584 = vmatprep.subr.mxu0 0.0
    %585 = vmatpush1.xpose.msra.mxu0 0.0
    %586 = vmatprep.subr.mxu0 0.0
    %587 = vmatpush1.xpose.msra.mxu0 0.0
    %588 = vmatprep.subr.mxu0 0.0
    %589 = vmatpush1.xpose.msra.mxu0 0.0
    %590 = vmatprep.subr.mxu0 0.0
    %591 = vmatpush1.xpose.msra.mxu0 0.0
    %592 = vmatprep.mubr.f32.mxu0 0.0
    %v593 = vand.u32 %v60, 4294901760
    %594 = vmatmul.mubr.f32.gmra.mrb[0].mxu0 %v593
    %v595 = vpop.f32.mrb[0].mxu0
    %v596 = vadd.f32 %v515, %v595
    %v597 = vpop.f32.mrb[0].mxu0
    %598 = vmatprep.mubr.f32.mxu0 0.0
    %v599 = vand.u32 %v63, 4294901760
    %600 = vmatmul.mubr.f32.gmra.mrb[0].mxu0 %v599
    %v601 = vpop.f32.mrb[0].mxu0
    %v602 = vadd.f32 %v521, %v601
    %v603 = vpop.f32.mrb[0].mxu0
    %604 = vdwg.mxu0
    %v605 = vadd.f32 %v50, %v596
    %v606 = vadd.f32 %v51, %v602
    %607 = vst.msk [vmem:[#allocation2] sm:$0xff] %vm58, %v605
    %608 = vst.msk [vmem:[#allocation2 + $0x8] sm:$0xff] %vm58, %v606
    // Predicated region
    $region26: #{tpu_custom_call.1} parent=1 // pred_check
      %p609 = pneg %p43
    $region27: #{tpu_custom_call.1} parent=1 // pred_check_branch
      %611 = sbr.rel (%p609) target = $region29
    $region28: #{tpu_custom_call.1} parent=1 // pred_region
      %v612 = vld [vmem:[#allocation2] sm:$0xff]
      %v613 = vld [vmem:[#allocation2 + $0x8] sm:$0xff]
      %v614 = vld [vmem:[%s2] sm:$0x1]
      %v616 = vlaneseq
      %v617 = vshrl.u32 %v616, 7
      %v618 = vsub.s32 0, %v617
      %v619 = vrot.slane %v614, %v618
      %v621 = vadd.f32 %v612, %v619
      %v622 = vadd.f32 %v613, %v619
      %623 = vst.msk [vmem:[#allocation8] sm:$0xff] %vm58, %v621
      %624 = vst.msk [vmem:[#allocation8 + $0x8] sm:$0xff] %vm58, %v622
    $region29: #{tpu_custom_call.1} parent=1 // pred_fallthru
      _
    // Predicated region
    $region30: #{tpu_custom_call.1} parent=1 // pred_check
      _
    $region31: #{tpu_custom_call.1} parent=1 // pred_check_branch
      %626 = sbr.rel (0) target = $region33
    $region32: #{tpu_custom_call.1} parent=1 // pred_region
      %s628 = ssub.s32 256, 256
      %629 = vsyncadd [#allocation5], %s628
      %s630 = sshll.u32 [#allocation8], 4
      %s631 = int_to_ptr.vmem [resolvable:$true] %s630
      %636 = dma.vmem_to_hbm [thread:$0]  %s631, 256, %s3, [#allocation5], 128, 128, 8
    $region33: #{tpu_custom_call.1} parent=1 // pred_fallthru
      _
    // Predicated region
    $region34: #{tpu_custom_call.1} parent=1 // pred_check
      _
    $region35: #{tpu_custom_call.1} parent=1 // pred_check_branch
      %638 = sbr.rel (0) target = $region37
    $region36: #{tpu_custom_call.1} parent=1 // pred_region
      %639 = dma.done [#allocation5], 256
    $region37: #{tpu_custom_call.1} parent=1 // pred_fallthru
      _
    %640 = vsyncpa [#allocation4], 1
    %641 = vsyncpa [#allocation7], 1
    %642 = vsyncpa [#allocation5], 1

</llo_original>
